<compile_context>
chip_gen: v7x
topology: tpu7x:2x2x1
jax: 0.10.0
libtpu: 0.0.40
codegen_flags: <defaults>
</compile_context>

<pallas_src>
import functools

import jax
import jax.numpy as jnp
import numpy as np
from jax.experimental import pallas as pl
from jax.experimental.pallas import tpu as pltpu


def _soft_dot_kernel(*refs, has_mask: bool, fuse_out: bool):
    if has_mask:
        (h_ref, ctx_ref, bias_ref, w_in_t_ref, w_out_t_ref,
         h_tilde_ref, attn_ref) = refs
    else:
        (h_ref, ctx_ref, w_in_t_ref, w_out_t_ref,
         h_tilde_ref, attn_ref) = refs
        bias_ref = None

    f32 = jnp.float32
    h = h_ref[...]                       # (TB, D)   compute dtype (bf16 or f32)
    ctx = ctx_ref[...]                   # (TB, S, D)
    w_in_t = w_in_t_ref[...]             # (D, D)    = W_in^T (pre-transposed)
    w_out_t = w_out_t_ref[...]           # (2D, D)   = W_out^T (pre-transposed)
    cdt = ctx.dtype
    dim = w_out_t.shape[1]

    # target = h @ W_in^T   (MXU, f32 accumulation)
    target = jnp.dot(h, w_in_t, preferred_element_type=f32)            # (TB, D)

    # Attention scores on the MXU: (TB, 1, D) x (TB, S, D) -> (TB, 1, S)
    scores = jnp.einsum(
        "bqd,bsd->bqs",
        target[:, None, :].astype(cdt), ctx,
        preferred_element_type=f32)                                     # (TB, 1, S)

    if has_mask:
        # Additive bias: 0 for kept positions, -1e30 for masked ones (single VPU add,
        # and no NaN when an entire row is masked).
        scores = scores + bias_ref[...][:, None, :]

    # Numerically-stable softmax over the sequence axis (f32).
    m = jnp.max(scores, axis=-1, keepdims=True)
    e = jnp.exp(scores - m)
    attn = e / jnp.sum(e, axis=-1, keepdims=True)                       # (TB, 1, S)

    # Weighted context on the MXU: (TB, 1, S) x (TB, S, D) -> (TB, 1, D)
    weighted = jnp.einsum(
        "bqs,bsd->bqd", attn.astype(cdt), ctx,
        preferred_element_type=f32)[:, 0, :]                            # (TB, D)

    # h_tilde = tanh(concat(weighted, h) @ W_out^T)
    if fuse_out:
        # D % 128 == 0: lane-axis concat is layout-free -> single K=2D MXU pass.
        cat = jnp.concatenate([weighted.astype(cdt), h], axis=-1)       # (TB, 2D)
        out = jnp.dot(cat, w_out_t, preferred_element_type=f32)
    else:
        # Static sublane slices of W_out^T; two MXU dots, no in-kernel concat/transpose.
        w_c = w_out_t[:dim, :]
        w_h = w_out_t[dim:, :]
        out = (jnp.dot(weighted.astype(cdt), w_c, preferred_element_type=f32)
               + jnp.dot(h, w_h, preferred_element_type=f32))

    h_tilde_ref[...] = jnp.tanh(out).astype(h_tilde_ref.dtype)
    attn_ref[...] = attn[:, 0, :].astype(attn_ref.dtype)


def soft_dot_attention(h, context, w_in, w_out, mask=None, *,
                       compute_dtype=jnp.bfloat16, block_b=None):
    """
    h:       (B, D) float
    context: (B, S, D) float
    w_in:    (D, D)   linear_in.weight  (PyTorch convention: y = x @ W^T)
    w_out:   (D, 2D)  linear_out.weight
    mask:    optional (B, S) bool/int, True/nonzero entries are masked out
    returns: (h_tilde (B, D) f32, attn (B, S) f32)
    """
    B, S, D = context.shape
    assert h.shape == (B, D)
    assert w_in.shape == (D, D)
    assert w_out.shape == (D, 2 * D)

    cdt = compute_dtype
    h_c = h.astype(cdt)
    ctx_c = context.astype(cdt)
    # Pre-transpose the weights once in the wrapper so the kernel never emits a transpose.
    w_in_t = jnp.transpose(w_in).astype(cdt)      # (D, D)  == W_in^T
    w_out_t = jnp.transpose(w_out).astype(cdt)    # (2D, D) == W_out^T

    # Batch tile: biggest tile that keeps the (double-buffered) ctx block well under
    # the default scoped VMEM on all generations (v5e 16 MiB, v6e/v7x 32 MiB).
    if block_b is None:
        ctx_row_bytes = max(1, S * D * jnp.dtype(cdt).itemsize)
        budget = 4 * 1024 * 1024                  # ~4 MiB per ctx block (x2 buffers)
        block_b = max(8, min(512, budget // ctx_row_bytes))
    if block_b >= B:
        tb = B                                    # single full block (no (8,·) constraint)
    else:
        tb = max(8, (block_b // 8) * 8)           # keep sublane dim a multiple of 8
    grid = (pl.cdiv(B, tb),)

    fuse_out = (D % 128 == 0)
    has_mask = mask is not None

    in_specs = [
        pl.BlockSpec((tb, D), lambda i: (i, 0)),
        pl.BlockSpec((tb, S, D), lambda i: (i, 0, 0)),
    ]
    operands = [h_c, ctx_c]
    if has_mask:
        bias = jnp.where(mask.astype(jnp.bool_),
                         jnp.float32(-1e30), jnp.float32(0.0))
        in_specs.append(pl.BlockSpec((tb, S), lambda i: (i, 0)))
        operands.append(bias)
    in_specs += [
        pl.BlockSpec((D, D), lambda i: (0, 0)),
        pl.BlockSpec((2 * D, D), lambda i: (0, 0)),
    ]
    operands += [w_in_t, w_out_t]

    out_specs = (
        pl.BlockSpec((tb, D), lambda i: (i, 0)),
        pl.BlockSpec((tb, S), lambda i: (i, 0)),
    )
    out_shape = (
        jax.ShapeDtypeStruct((B, D), jnp.float32),
        jax.ShapeDtypeStruct((B, S), jnp.float32),
    )

    kernel = functools.partial(_soft_dot_kernel, has_mask=has_mask, fuse_out=fuse_out)
    h_tilde, attn = pl.pallas_call(
        kernel,
        grid=grid,
        in_specs=in_specs,
        out_specs=out_specs,
        out_shape=out_shape,
        compiler_params=pltpu.CompilerParams(
            dimension_semantics=("parallel",)),
    )(*operands)
    return h_tilde, attn


def _reference_np(h, context, w_in, w_out, mask=None):
    h = np.asarray(h, np.float64)
    context = np.asarray(context, np.float64)
    w_in = np.asarray(w_in, np.float64)
    w_out = np.asarray(w_out, np.float64)
    target = h @ w_in.T
    logits = np.einsum("bsd,bd->bs", context, target)
    if mask is not None:
        logits = np.where(np.asarray(mask, bool), -1e30, logits)
    logits = logits - logits.max(axis=1, keepdims=True)
    e = np.exp(logits)
    attn = e / e.sum(axis=1, keepdims=True)
    weighted = np.einsum("bs,bsd->bd", attn, context)
    cat = np.concatenate([weighted, h], axis=1)
    h_tilde = np.tanh(cat @ w_out.T)
    return h_tilde, attn


if __name__ == "__main__":
    B, S, D = 2, 8, 32

    key = jax.random.PRNGKey(0)
    k_h, k_ctx, k_win, k_wout, k_mask = jax.random.split(key, 5)

    h = jax.random.normal(k_h, (B, D), dtype=jnp.float32)
    context = jax.random.normal(k_ctx, (B, S, D), dtype=jnp.float32)

    bound_in = 1.0 / np.sqrt(D)
    bound_out = 1.0 / np.sqrt(2 * D)
    w_in = jax.random.uniform(k_win, (D, D), jnp.float32, -bound_in, bound_in)
    w_out = jax.random.uniform(k_wout, (D, 2 * D), jnp.float32, -bound_out, bound_out)
    mask = jax.random.bernoulli(k_mask, 0.25, (B, S))

    # --- bf16-fed MXU path (default), unmasked and masked ---------------------
    ht, at = soft_dot_attention(h, context, w_in, w_out, mask=None)
    jax.block_until_ready((ht, at))
    ht_r, at_r = _reference_np(h, context, w_in, w_out, mask=None)
    np.testing.assert_allclose(np.asarray(ht), ht_r, atol=5e-2, rtol=5e-2)
    np.testing.assert_allclose(np.asarray(at), at_r, atol=5e-2, rtol=5e-2)

    ht_m, at_m = soft_dot_attention(h, context, w_in, w_out, mask=mask)
    jax.block_until_ready((ht_m, at_m))
    ht_mr, at_mr = _reference_np(h, context, w_in, w_out, mask=np.asarray(mask))
    np.testing.assert_allclose(np.asarray(ht_m), ht_mr, atol=5e-2, rtol=5e-2)
    np.testing.assert_allclose(np.asarray(at_m), at_mr, atol=5e-2, rtol=5e-2)

    # --- f32 path + multi-step batch grid (exercises tiling / boundary block) --
    B2 = 20
    k_h2, k_ctx2 = jax.random.split(jax.random.PRNGKey(1), 2)
    h2 = jax.random.normal(k_h2, (B2, D), dtype=jnp.float32)
    ctx2 = jax.random.normal(k_ctx2, (B2, S, D), dtype=jnp.float32)
    ht2, at2 = soft_dot_attention(h2, ctx2, w_in, w_out, mask=None,
                                  compute_dtype=jnp.float32, block_b=8)
    jax.block_until_ready((ht2, at2))
    ht2_r, at2_r = _reference_np(h2, ctx2, w_in, w_out, mask=None)
    np.testing.assert_allclose(np.asarray(ht2), ht2_r, atol=5e-2, rtol=5e-2)
    np.testing.assert_allclose(np.asarray(at2), at2_r, atol=5e-2, rtol=5e-2)

    print("KERNEL_OK")
</pallas_src>

<mosaic_0001>
module attributes {stable_mosaic.version = 11 : i64} {
  func.func @_soft_dot_kernel(%arg0: i32, %arg1: memref<2x32xbf16, #tpu.memory_space<vmem>>, %arg2: memref<2x8x32xbf16, #tpu.memory_space<vmem>>, %arg3: memref<32x32xbf16, #tpu.memory_space<vmem>>, %arg4: memref<64x32xbf16, #tpu.memory_space<vmem>>, %arg5: memref<2x32xf32, #tpu.memory_space<vmem>>, %arg6: memref<2x8xf32, #tpu.memory_space<vmem>>) attributes {dimension_semantics = [#tpu.dimension_semantics<parallel>], iteration_bounds = array<i64: 1>, scalar_prefetch = 0 : i64, scratch_operands = 0 : i64, tpu.core_type = #tpu.core_type<tc>, window_params = [{transform_indices = @transform_0, window_bounds = array<i64: 2, 32>}, {transform_indices = @transform_1, window_bounds = array<i64: 2, 8, 32>}, {pipeline_mode = #tpu.pipeline_mode<synchronous>, transform_indices = @transform_2, window_bounds = array<i64: 32, 32>}, {pipeline_mode = #tpu.pipeline_mode<synchronous>, transform_indices = @transform_3, window_bounds = array<i64: 64, 32>}, {transform_indices = @transform_4, window_bounds = array<i64: 2, 32>}, {transform_indices = @transform_5, window_bounds = array<i64: 2, 8>}]} {
    %c0 = arith.constant 0 : index
    %c0_0 = arith.constant 0 : index
    %0 = vector.load %arg1[%c0, %c0_0] : memref<2x32xbf16, #tpu.memory_space<vmem>>, vector<2x32xbf16>
    %c0_1 = arith.constant 0 : index
    %c0_2 = arith.constant 0 : index
    %c0_3 = arith.constant 0 : index
    %1 = vector.load %arg2[%c0_1, %c0_2, %c0_3] : memref<2x8x32xbf16, #tpu.memory_space<vmem>>, vector<2x8x32xbf16>
    %c0_4 = arith.constant 0 : index
    %c0_5 = arith.constant 0 : index
    %2 = vector.load %arg3[%c0_4, %c0_5] : memref<32x32xbf16, #tpu.memory_space<vmem>>, vector<32x32xbf16>
    %c0_6 = arith.constant 0 : index
    %c0_7 = arith.constant 0 : index
    %3 = vector.load %arg4[%c0_6, %c0_7] : memref<64x32xbf16, #tpu.memory_space<vmem>>, vector<64x32xbf16>
    %cst = arith.constant dense<0.000000e+00> : vector<2x32xf32>
    %4 = tpu.matmul %0, %2, %cst {dimension_numbers = #tpu.dot_dimension_numbers<[1], [0], [0], [1], [0, 0, 1, 1], [], []>} : vector<2x32xbf16>, vector<32x32xbf16>, vector<2x32xf32> -> vector<2x32xf32>
    %5 = vector.shape_cast %4 : vector<2x32xf32> to vector<2x1x32xf32>
    %6 = arith.truncf %5 : vector<2x1x32xf32> to vector<2x1x32xbf16>
    "tpu.trace_start"() <{level = 10 : i32, message = "bqd,bsd->bqs"}> : () -> ()
    %cst_8 = arith.constant dense<0.000000e+00> : vector<2x1x8xf32>
    %7 = tpu.matmul %6, %1, %cst_8 {dimension_numbers = #tpu.dot_dimension_numbers<[2], [2], [1], [1], [0, 0, 0, 1, 1, 1], [0], [0]>} : vector<2x1x32xbf16>, vector<2x8x32xbf16>, vector<2x1x8xf32> -> vector<2x1x8xf32>
    "tpu.trace_stop"() : () -> ()
    %cst_9 = arith.constant dense<0xFF800000> : vector<2x1xf32>
    %8 = vector.multi_reduction <maximumf>, %7, %cst_9 [2] : vector<2x1x8xf32> to vector<2x1xf32>
    %9 = vector.shape_cast %8 : vector<2x1xf32> to vector<2x1x1xf32>
    %10 = vector.broadcast %9 : vector<2x1x1xf32> to vector<2x1x8xf32>
    %11 = arith.subf %7, %10 : vector<2x1x8xf32>
    %12 = math.exp %11 : vector<2x1x8xf32>
    %cst_10 = arith.constant dense<0.000000e+00> : vector<2x1xf32>
    %13 = vector.multi_reduction <add>, %12, %cst_10 [2] : vector<2x1x8xf32> to vector<2x1xf32>
    %14 = vector.shape_cast %13 : vector<2x1xf32> to vector<2x1x1xf32>
    %15 = vector.broadcast %14 : vector<2x1x1xf32> to vector<2x1x8xf32>
    %16 = arith.divf %12, %15 : vector<2x1x8xf32>
    %17 = arith.truncf %16 : vector<2x1x8xf32> to vector<2x1x8xbf16>
    "tpu.trace_start"() <{level = 10 : i32, message = "bqs,bsd->bqd"}> : () -> ()
    %cst_11 = arith.constant dense<0.000000e+00> : vector<2x1x32xf32>
    %18 = tpu.matmul %17, %1, %cst_11 {dimension_numbers = #tpu.dot_dimension_numbers<[2], [1], [1], [2], [0, 0, 0, 1, 1, 2], [0], [0]>} : vector<2x1x8xbf16>, vector<2x8x32xbf16>, vector<2x1x32xf32> -> vector<2x1x32xf32>
    "tpu.trace_stop"() : () -> ()
    %19 = vector.shape_cast %18 : vector<2x1x32xf32> to vector<2x32xf32>
    %20 = vector.extract_strided_slice %3 {offsets = [0, 0], sizes = [32, 32], strides = [1, 1]} : vector<64x32xbf16> to vector<32x32xbf16>
    %21 = vector.extract_strided_slice %3 {offsets = [32, 0], sizes = [32, 32], strides = [1, 1]} : vector<64x32xbf16> to vector<32x32xbf16>
    %22 = arith.truncf %19 : vector<2x32xf32> to vector<2x32xbf16>
    %cst_12 = arith.constant dense<0.000000e+00> : vector<2x32xf32>
    %23 = tpu.matmul %22, %20, %cst_12 {dimension_numbers = #tpu.dot_dimension_numbers<[1], [0], [0], [1], [0, 0, 1, 1], [], []>} : vector<2x32xbf16>, vector<32x32xbf16>, vector<2x32xf32> -> vector<2x32xf32>
    %cst_13 = arith.constant dense<0.000000e+00> : vector<2x32xf32>
    %24 = tpu.matmul %0, %21, %cst_13 {dimension_numbers = #tpu.dot_dimension_numbers<[1], [0], [0], [1], [0, 0, 1, 1], [], []>} : vector<2x32xbf16>, vector<32x32xbf16>, vector<2x32xf32> -> vector<2x32xf32>
    %25 = arith.addf %23, %24 : vector<2x32xf32>
    %26 = math.tanh %25 : vector<2x32xf32>
    %c0_14 = arith.constant 0 : index
    %c0_15 = arith.constant 0 : index
    %27 = vector.load %arg5[%c0_14, %c0_15] : memref<2x32xf32, #tpu.memory_space<vmem>>, vector<2x32xf32>
    tpu.vector_store %arg5[%c0_14, %c0_15], %26 {strides = array<i32>} : memref<2x32xf32, #tpu.memory_space<vmem>>, vector<2x32xf32>,
    %28 = vector.shape_cast %16 : vector<2x1x8xf32> to vector<2x8xf32>
    %c0_16 = arith.constant 0 : index
    %c0_17 = arith.constant 0 : index
    %29 = vector.load %arg6[%c0_16, %c0_17] : memref<2x8xf32, #tpu.memory_space<vmem>>, vector<2x8xf32>
    tpu.vector_store %arg6[%c0_16, %c0_17], %28 {strides = array<i32>} : memref<2x8xf32, #tpu.memory_space<vmem>>, vector<2x8xf32>,
    return
  }
  func.func @transform_0(%arg0: i32) -> (i32, i32) {
    %c0_i32 = arith.constant 0 : i32
    %c0_i32_0 = arith.constant 0 : i32
    return %arg0, %c0_i32 : i32, i32
  }
  func.func @transform_1(%arg0: i32) -> (i32, i32, i32) {
    %c0_i32 = arith.constant 0 : i32
    %c0_i32_0 = arith.constant 0 : i32
    %c0_i32_1 = arith.constant 0 : i32
    return %arg0, %c0_i32, %c0_i32_0 : i32, i32, i32
  }
  func.func @transform_2(%arg0: i32) -> (i32, i32) {
    %c0_i32 = arith.constant 0 : i32
    %c0_i32_0 = arith.constant 0 : i32
    %c0_i32_1 = arith.constant 0 : i32
    return %c0_i32, %c0_i32_0 : i32, i32
  }
  func.func @transform_3(%arg0: i32) -> (i32, i32) {
    %c0_i32 = arith.constant 0 : i32
    %c0_i32_0 = arith.constant 0 : i32
    %c0_i32_1 = arith.constant 0 : i32
    return %c0_i32, %c0_i32_0 : i32, i32
  }
  func.func @transform_4(%arg0: i32) -> (i32, i32) {
    %c0_i32 = arith.constant 0 : i32
    %c0_i32_0 = arith.constant 0 : i32
    return %arg0, %c0_i32 : i32, i32
  }
  func.func @transform_5(%arg0: i32) -> (i32, i32) {
    %c0_i32 = arith.constant 0 : i32
    %c0_i32_0 = arith.constant 0 : i32
    return %arg0, %c0_i32 : i32, i32
  }
}

</mosaic_0001>

<llo_original>
// kernel: tpu_custom_call.1
$region0: #{tpu_custom_call.1}
  #allocation0 [shape = 'u32[]', space=smem, size = 0x4, offset = 0x4, fixed_abs, tag = 'smem constant byte address 0x4 - core index']
  #allocation1 [shape = 'u32[144,128]{1,0:T(1,128)}', space=vmem, size = 0x12000, scoped, tag = 'internal scratch']
  %s0 = inlined_call_operand.vmem [shape: bf16[2,32], index: 0, kind: input, shape index: {}]
  %s1 = inlined_call_operand.vmem [shape: bf16[2,8,32], index: 1, kind: input, shape index: {}]
  %s2 = inlined_call_operand.vmem [shape: bf16[32,32], index: 2, kind: input, shape index: {}]
  %s3 = inlined_call_operand.vmem [shape: bf16[64,32], index: 3, kind: input, shape index: {}]
  %s4 = inlined_call_operand.hbm [shape: f32[2,32], index: 4, kind: output, shape index: {0}]
  %s5 = inlined_call_operand.hbm [shape: f32[2,8], index: 5, kind: output, shape index: {1}]
  %6 = xla_tuple %s4, %s5
  %s7 = sld [smem:[#allocation0]]
  $region34: #{tpu_custom_call.1} parent=0
    _
  %s9 = ssub.s32 1, %s7
  %s10 = scalar_select 0, %s9, %s7
  $region1: #{tpu_custom_call.1} parent=0
    #allocation2 [shape = 'u8[1024]{0}', space=vmem, size = 0x400, scoped, tag = 'output window, operand 0, single buffered']
    #allocation3 [shape = 's32[1]{0}', space=sflag, size = 0x4, scoped, tag = 'scoped memory for tpu_custom_call.1']
    #allocation4 [shape = 'u8[1024]{0}', space=vmem, size = 0x400, scoped, tag = 'output window, operand 1, single buffered']
    #allocation5 [shape = 's32[1]{0}', space=sflag, size = 0x4, scoped, tag = 'scoped memory for tpu_custom_call.1']
    %11 = vsyncpa [#allocation3], 0
    %12 = vsyncpa [#allocation5], 0
    // Predicated region
    $region2: #{tpu_custom_call.1} parent=1 // pred_check
      _
    $region3: #{tpu_custom_call.1} parent=1 // pred_check_branch
      %14 = sbr.rel (0) target = $region5
    $region4: #{tpu_custom_call.1} parent=1 // pred_region
      _
    $region5: #{tpu_custom_call.1} parent=1 // pred_fallthru
      _
    // Predicated region
    $region6: #{tpu_custom_call.1} parent=1 // pred_check
      _
    $region7: #{tpu_custom_call.1} parent=1 // pred_check_branch
      %16 = sbr.rel (0) target = $region9
    $region8: #{tpu_custom_call.1} parent=1 // pred_region
      _
    $region9: #{tpu_custom_call.1} parent=1 // pred_fallthru
      _
    // Predicated region
    $region10: #{tpu_custom_call.1} parent=1 // pred_check
      _
    $region11: #{tpu_custom_call.1} parent=1 // pred_check_branch
      %18 = sbr.rel (0) target = $region13
    $region12: #{tpu_custom_call.1} parent=1 // pred_region
      _
    $region13: #{tpu_custom_call.1} parent=1 // pred_fallthru
      _
    // Predicated region
    $region14: #{tpu_custom_call.1} parent=1 // pred_check
      _
    $region15: #{tpu_custom_call.1} parent=1 // pred_check_branch
      %20 = sbr.rel (0) target = $region17
    $region16: #{tpu_custom_call.1} parent=1 // pred_region
      _
    $region17: #{tpu_custom_call.1} parent=1 // pred_fallthru
      _
    %v22 = vld [vmem:[%s0] sm:$0x1]
    %v23 = vld [vmem:[%s1] sm:$0xf]
    %v24 = vld [vmem:[%s1 + $0x4] sm:$0xf]
    %v25 = vld [vmem:[%s2] sm:$0xf]
    %v26 = vld [vmem:[%s2 + $0x4] sm:$0xf]
    %v27 = vld [vmem:[%s2 + $0x8] sm:$0xf]
    %v28 = vld [vmem:[%s2 + $0xc] sm:$0xf]
    %v29 = vld [vmem:[%s3] sm:$0xf]
    %v30 = vld [vmem:[%s3 + $0x4] sm:$0xf]
    %v31 = vld [vmem:[%s3 + $0x8] sm:$0xf]
    %v32 = vld [vmem:[%s3 + $0xc] sm:$0xf]
    %v33 = vld [vmem:[%s3 + $0x10] sm:$0xf]
    %v34 = vld [vmem:[%s3 + $0x14] sm:$0xf]
    %v35 = vld [vmem:[%s3 + $0x18] sm:$0xf]
    %v36 = vld [vmem:[%s3 + $0x1c] sm:$0xf]
    %v41 = vunpack.c.l.b16 %v25
    %v42 = vunpack.c.l.b16 %v26
    %v43 = vunpack.c.l.b16 %v27
    %v44 = vunpack.c.l.b16 %v28
    %v45 = vpack.c.b16 %v42, %v41
    %v46 = vpack.c.b16 %v44, %v43
    %vm49 = vcmask 261120
    %v51 = vsel %vm49, %v22, 0
    %53 = vmatprep.subr.bf16.mxu0 0
    %54 = vmatpush1.bf16.msra.mxu0 %v45
    %55 = vmatprep.subr.bf16.mxu0 0
    %56 = vmatpush1.bf16.msra.mxu0 %v46
    %57 = vmatprep.subr.bf16.mxu0 0
    %58 = vmatpush1.bf16.msra.mxu0 0
    %59 = vmatprep.subr.bf16.mxu0 0
    %60 = vmatpush1.bf16.msra.mxu0 0
    %61 = vmatprep.subr.bf16.mxu0 0
    %62 = vmatpush1.bf16.msra.mxu0 0
    %63 = vmatprep.subr.bf16.mxu0 0
    %64 = vmatpush1.bf16.msra.mxu0 0
    %65 = vmatprep.subr.bf16.mxu0 0
    %66 = vmatpush1.bf16.msra.mxu0 0
    %67 = vmatprep.subr.bf16.mxu0 0
    %68 = vmatpush1.bf16.msra.mxu0 0
    %69 = vmatprep.subr.bf16.mxu0 0
    %70 = vmatpush1.bf16.msra.mxu0 0
    %71 = vmatprep.subr.bf16.mxu0 0
    %72 = vmatpush1.bf16.msra.mxu0 0
    %73 = vmatprep.subr.bf16.mxu0 0
    %74 = vmatpush1.bf16.msra.mxu0 0
    %75 = vmatprep.subr.bf16.mxu0 0
    %76 = vmatpush1.bf16.msra.mxu0 0
    %77 = vmatprep.subr.bf16.mxu0 0
    %78 = vmatpush1.bf16.msra.mxu0 0
    %79 = vmatprep.subr.bf16.mxu0 0
    %80 = vmatpush1.bf16.msra.mxu0 0
    %81 = vmatprep.subr.bf16.mxu0 0
    %82 = vmatpush1.bf16.msra.mxu0 0
    %83 = vmatprep.subr.bf16.mxu0 0
    %84 = vmatpush1.bf16.msra.mxu0 0
    %85 = vmatprep.mubr.bf16.mxu0 0
    %86 = vmatmul.mubr.bf16.gmra.mrb[0].mxu0 %v51
    %v87 = vpop.f32.mrb[0].mxu0
    %v88 = vadd.f32 0.0, %v87
    %v89 = vpop.f32.mrb[0].mxu0
    %v90 = vpop.f32.mrb[0].mxu0
    %v91 = vpop.f32.mrb[0].mxu0
    %92 = vdwg.mxu0
    %v95 = vunpack.c.l.s4 1966171168
    %v96 = vunpack.c.0.s8 %v95
    %v97 = vlaneseq
    %v98 = vshrl.u32 %v97, 7
    %v99 = vsub.s32 %v96, %v98
    %v100 = vrot.slane %v88, %v99
    %v101 = vcombine.high %v100, %v100
    %v103 = vunpack.c.l.s4 1966171168
    %v104 = vunpack.c.0.s8 %v103
    %v105 = vlaneseq
    %v106 = vshrl.u32 %v105, 7
    %v107 = vsub.s32 %v104, %v106
    %v108 = vrot.slane %v100, %v107
    %v110 = vunpack.c.l.s4 1966171168
    %v111 = vunpack.c.0.s8 %v110
    %v112 = vlaneseq
    %v113 = vshrl.u32 %v112, 7
    %v114 = vsub.s32 %v111, %v113
    %v115 = vrot.slane %v101, %v114
    %v118 = vpack.c.bf16 %v108, %v108
    %v119 = vpack.c.bf16 %v115, %v115
    %v121 = vsel %vm49, %v118, 0
    %v124 = vsel %vm49, %v23, 0
    %126 = vmatprep.subr.bf16.mxu0 0
    %127 = vmatpush1.bf16.xpose.msra.mxu0 %v124
    %128 = vmatprep.subr.bf16.mxu0 0
    %129 = vmatpush1.bf16.xpose.msra.mxu0 0
    %130 = vmatprep.subr.bf16.mxu0 0
    %131 = vmatpush1.bf16.xpose.msra.mxu0 0
    %132 = vmatprep.subr.bf16.mxu0 0
    %133 = vmatpush1.bf16.xpose.msra.mxu0 0
    %134 = vmatprep.subr.bf16.mxu0 0
    %135 = vmatpush1.bf16.xpose.msra.mxu0 0
    %136 = vmatprep.subr.bf16.mxu0 0
    %137 = vmatpush1.bf16.xpose.msra.mxu0 0
    %138 = vmatprep.subr.bf16.mxu0 0
    %139 = vmatpush1.bf16.xpose.msra.mxu0 0
    %140 = vmatprep.subr.bf16.mxu0 0
    %141 = vmatpush1.bf16.xpose.msra.mxu0 0
    %142 = vmatprep.subr.bf16.mxu0 0
    %143 = vmatpush1.bf16.xpose.msra.mxu0 0
    %144 = vmatprep.subr.bf16.mxu0 0
    %145 = vmatpush1.bf16.xpose.msra.mxu0 0
    %146 = vmatprep.subr.bf16.mxu0 0
    %147 = vmatpush1.bf16.xpose.msra.mxu0 0
    %148 = vmatprep.subr.bf16.mxu0 0
    %149 = vmatpush1.bf16.xpose.msra.mxu0 0
    %150 = vmatprep.subr.bf16.mxu0 0
    %151 = vmatpush1.bf16.xpose.msra.mxu0 0
    %152 = vmatprep.subr.bf16.mxu0 0
    %153 = vmatpush1.bf16.xpose.msra.mxu0 0
    %154 = vmatprep.subr.bf16.mxu0 0
    %155 = vmatpush1.bf16.xpose.msra.mxu0 0
    %156 = vmatprep.subr.bf16.mxu0 0
    %157 = vmatpush1.bf16.xpose.msra.mxu0 0
    %158 = vmatprep.mubr.bf16.mxu0 0
    %159 = vmatmul.mubr.bf16.gmra.mrb[0].mxu0 %v121
    %v160 = vpop.f32.mrb[0].mxu0
    %v161 = vadd.f32 0.0, %v160
    %v162 = vpop.f32.mrb[0].mxu0
    %v163 = vpop.f32.mrb[0].mxu0
    %v164 = vpop.f32.mrb[0].mxu0
    %165 = vdwg.mxu0
    %v167 = vsel %vm49, %v119, 0
    %v170 = vsel %vm49, %v24, 0
    %172 = vmatprep.subr.bf16.mxu0 0
    %173 = vmatpush1.bf16.xpose.msra.mxu0 %v170
    %174 = vmatprep.subr.bf16.mxu0 0
    %175 = vmatpush1.bf16.xpose.msra.mxu0 0
    %176 = vmatprep.subr.bf16.mxu0 0
    %177 = vmatpush1.bf16.xpose.msra.mxu0 0
    %178 = vmatprep.subr.bf16.mxu0 0
    %179 = vmatpush1.bf16.xpose.msra.mxu0 0
    %180 = vmatprep.subr.bf16.mxu0 0
    %181 = vmatpush1.bf16.xpose.msra.mxu0 0
    %182 = vmatprep.subr.bf16.mxu0 0
    %183 = vmatpush1.bf16.xpose.msra.mxu0 0
    %184 = vmatprep.subr.bf16.mxu0 0
    %185 = vmatpush1.bf16.xpose.msra.mxu0 0
    %186 = vmatprep.subr.bf16.mxu0 0
    %187 = vmatpush1.bf16.xpose.msra.mxu0 0
    %188 = vmatprep.subr.bf16.mxu0 0
    %189 = vmatpush1.bf16.xpose.msra.mxu0 0
    %190 = vmatprep.subr.bf16.mxu0 0
    %191 = vmatpush1.bf16.xpose.msra.mxu0 0
    %192 = vmatprep.subr.bf16.mxu0 0
    %193 = vmatpush1.bf16.xpose.msra.mxu0 0
    %194 = vmatprep.subr.bf16.mxu0 0
    %195 = vmatpush1.bf16.xpose.msra.mxu0 0
    %196 = vmatprep.subr.bf16.mxu0 0
    %197 = vmatpush1.bf16.xpose.msra.mxu0 0
    %198 = vmatprep.subr.bf16.mxu0 0
    %199 = vmatpush1.bf16.xpose.msra.mxu0 0
    %200 = vmatprep.subr.bf16.mxu0 0
    %201 = vmatpush1.bf16.xpose.msra.mxu0 0
    %202 = vmatprep.subr.bf16.mxu0 0
    %203 = vmatpush1.bf16.xpose.msra.mxu0 0
    %204 = vmatprep.mubr.bf16.mxu0 0
    %205 = vmatmul.mubr.bf16.gmra.mrb[0].mxu0 %v167
    %v206 = vpop.f32.mrb[0].mxu0
    %v207 = vadd.f32 0.0, %v206
    %v208 = vpop.f32.mrb[0].mxu0
    %v209 = vpop.f32.mrb[0].mxu0
    %v210 = vpop.f32.mrb[0].mxu0
    %211 = vdwg.mxu0
    %vm212 = vcmask 57344
    %v213 = vsel %vm212, %v161, -inf
    %214 = vmax.xlane.f32.xlu0 %v213
    %v215 = vpop.xlane.xlu0 %214
    %v216 = vsel %vm212, %v207, -inf
    %217 = vmax.xlane.f32.xlu0 %v216
    %v218 = vpop.xlane.xlu0 %217
    %v219 = vsub.f32 %v161, %v215
    %v220 = vsub.f32 %v207, %v218
    %v221 = vmul.f32 %v219, 1.442695
    %v222 = vpow.pop %v221
    %v223 = vmul.f32 %v220, 1.442695
    %v224 = vpow.pop %v223
    %v225 = vsel %vm212, %v222, 0.0
    %226 = vadd.xlane.f32.xlu0 %v225
    %v227 = vpop.xlane.xlu0 %226
    %v228 = vsel %vm212, %v224, 0.0
    %229 = vadd.xlane.f32.xlu0 %v228
    %v230 = vpop.xlane.xlu0 %229
    %v231 = vrcp.pop %v227
    %v232 = vmul.f32 %v222, %v231
    %v233 = vrcp.pop %v230
    %v234 = vmul.f32 %v224, %v233
    %v235 = vpack.c.bf16 %v232, %v232
    %v236 = vpack.c.bf16 %v234, %v234
    %vm237 = vcmask 64512
    %v239 = vsel %vm237, %v235, 0
    %vm241 = vcmask 1043456
    %v242 = vsel %vm241, %v23, 0
    %244 = vmatprep.subr.bf16.mxu0 0
    %245 = vmatpush1.bf16.msra.mxu0 %v242
    %246 = vmatprep.subr.bf16.mxu0 0
    %247 = vmatpush1.bf16.msra.mxu0 0
    %248 = vmatprep.subr.bf16.mxu0 0
    %249 = vmatpush1.bf16.msra.mxu0 0
    %250 = vmatprep.subr.bf16.mxu0 0
    %251 = vmatpush1.bf16.msra.mxu0 0
    %252 = vmatprep.subr.bf16.mxu0 0
    %253 = vmatpush1.bf16.msra.mxu0 0
    %254 = vmatprep.subr.bf16.mxu0 0
    %255 = vmatpush1.bf16.msra.mxu0 0
    %256 = vmatprep.subr.bf16.mxu0 0
    %257 = vmatpush1.bf16.msra.mxu0 0
    %258 = vmatprep.subr.bf16.mxu0 0
    %259 = vmatpush1.bf16.msra.mxu0 0
    %260 = vmatprep.subr.bf16.mxu0 0
    %261 = vmatpush1.bf16.msra.mxu0 0
    %262 = vmatprep.subr.bf16.mxu0 0
    %263 = vmatpush1.bf16.msra.mxu0 0
    %264 = vmatprep.subr.bf16.mxu0 0
    %265 = vmatpush1.bf16.msra.mxu0 0
    %266 = vmatprep.subr.bf16.mxu0 0
    %267 = vmatpush1.bf16.msra.mxu0 0
    %268 = vmatprep.subr.bf16.mxu0 0
    %269 = vmatpush1.bf16.msra.mxu0 0
    %270 = vmatprep.subr.bf16.mxu0 0
    %271 = vmatpush1.bf16.msra.mxu0 0
    %272 = vmatprep.subr.bf16.mxu0 0
    %273 = vmatpush1.bf16.msra.mxu0 0
    %274 = vmatprep.subr.bf16.mxu0 0
    %275 = vmatpush1.bf16.msra.mxu0 0
    %276 = vmatprep.mubr.bf16.mxu0 0
    %277 = vmatmul.mubr.bf16.gmra.mrb[0].mxu0 %v239
    %v278 = vpop.f32.mrb[0].mxu0
    %v279 = vadd.f32 0.0, %v278
    %v280 = vpop.f32.mrb[0].mxu0
    %v281 = vpop.f32.mrb[0].mxu0
    %v282 = vpop.f32.mrb[0].mxu0
    %283 = vdwg.mxu0
    %v285 = vsel %vm237, %v236, 0
    %v287 = vsel %vm241, %v24, 0
    %289 = vmatprep.subr.bf16.mxu0 0
    %290 = vmatpush1.bf16.msra.mxu0 %v287
    %291 = vmatprep.subr.bf16.mxu0 0
    %292 = vmatpush1.bf16.msra.mxu0 0
    %293 = vmatprep.subr.bf16.mxu0 0
    %294 = vmatpush1.bf16.msra.mxu0 0
    %295 = vmatprep.subr.bf16.mxu0 0
    %296 = vmatpush1.bf16.msra.mxu0 0
    %297 = vmatprep.subr.bf16.mxu0 0
    %298 = vmatpush1.bf16.msra.mxu0 0
    %299 = vmatprep.subr.bf16.mxu0 0
    %300 = vmatpush1.bf16.msra.mxu0 0
    %301 = vmatprep.subr.bf16.mxu0 0
    %302 = vmatpush1.bf16.msra.mxu0 0
    %303 = vmatprep.subr.bf16.mxu0 0
    %304 = vmatpush1.bf16.msra.mxu0 0
    %305 = vmatprep.subr.bf16.mxu0 0
    %306 = vmatpush1.bf16.msra.mxu0 0
    %307 = vmatprep.subr.bf16.mxu0 0
    %308 = vmatpush1.bf16.msra.mxu0 0
    %309 = vmatprep.subr.bf16.mxu0 0
    %310 = vmatpush1.bf16.msra.mxu0 0
    %311 = vmatprep.subr.bf16.mxu0 0
    %312 = vmatpush1.bf16.msra.mxu0 0
    %313 = vmatprep.subr.bf16.mxu0 0
    %314 = vmatpush1.bf16.msra.mxu0 0
    %315 = vmatprep.subr.bf16.mxu0 0
    %316 = vmatpush1.bf16.msra.mxu0 0
    %317 = vmatprep.subr.bf16.mxu0 0
    %318 = vmatpush1.bf16.msra.mxu0 0
    %319 = vmatprep.subr.bf16.mxu0 0
    %320 = vmatpush1.bf16.msra.mxu0 0
    %321 = vmatprep.mubr.bf16.mxu0 0
    %322 = vmatmul.mubr.bf16.gmra.mrb[0].mxu0 %v285
    %v323 = vpop.f32.mrb[0].mxu0
    %v324 = vadd.f32 0.0, %v323
    %v325 = vpop.f32.mrb[0].mxu0
    %v326 = vpop.f32.mrb[0].mxu0
    %v327 = vpop.f32.mrb[0].mxu0
    %328 = vdwg.mxu0
    %v329 = vpack.c.bf16 %v279, %v279
    %v330 = vpack.c.bf16 %v324, %v324
    %v335 = vunpack.c.l.b16 %v33
    %v336 = vunpack.c.l.b16 %v34
    %v337 = vunpack.c.l.b16 %v35
    %v338 = vunpack.c.l.b16 %v36
    %v339 = vpack.c.b16 %v336, %v335
    %v340 = vpack.c.b16 %v338, %v337
    %343 = vmatprep.subr.bf16.mxu0 0
    %344 = vmatpush1.bf16.msra.mxu0 %v339
    %345 = vmatprep.subr.bf16.mxu0 0
    %346 = vmatpush1.bf16.msra.mxu0 %v340
    %347 = vmatprep.subr.bf16.mxu0 0
    %348 = vmatpush1.bf16.msra.mxu0 0
    %349 = vmatprep.subr.bf16.mxu0 0
    %350 = vmatpush1.bf16.msra.mxu0 0
    %351 = vmatprep.subr.bf16.mxu0 0
    %352 = vmatpush1.bf16.msra.mxu0 0
    %353 = vmatprep.subr.bf16.mxu0 0
    %354 = vmatpush1.bf16.msra.mxu0 0
    %355 = vmatprep.subr.bf16.mxu0 0
    %356 = vmatpush1.bf16.msra.mxu0 0
    %357 = vmatprep.subr.bf16.mxu0 0
    %358 = vmatpush1.bf16.msra.mxu0 0
    %359 = vmatprep.subr.bf16.mxu0 0
    %360 = vmatpush1.bf16.msra.mxu0 0
    %361 = vmatprep.subr.bf16.mxu0 0
    %362 = vmatpush1.bf16.msra.mxu0 0
    %363 = vmatprep.subr.bf16.mxu0 0
    %364 = vmatpush1.bf16.msra.mxu0 0
    %365 = vmatprep.subr.bf16.mxu0 0
    %366 = vmatpush1.bf16.msra.mxu0 0
    %367 = vmatprep.subr.bf16.mxu0 0
    %368 = vmatpush1.bf16.msra.mxu0 0
    %369 = vmatprep.subr.bf16.mxu0 0
    %370 = vmatpush1.bf16.msra.mxu0 0
    %371 = vmatprep.subr.bf16.mxu0 0
    %372 = vmatpush1.bf16.msra.mxu0 0
    %373 = vmatprep.subr.bf16.mxu0 0
    %374 = vmatpush1.bf16.msra.mxu0 0
    %375 = vmatprep.mubr.bf16.mxu0 0
    %376 = vmatmul.mubr.bf16.gmra.mrb[0].mxu0 %v51
    %v377 = vpop.f32.mrb[0].mxu0
    %v378 = vadd.f32 0.0, %v377
    %v379 = vpop.f32.mrb[0].mxu0
    %v380 = vpop.f32.mrb[0].mxu0
    %v381 = vpop.f32.mrb[0].mxu0
    %382 = vdwg.mxu0
    %v385 = vunpack.c.l.b16 %v329
    %v386 = vunpack.c.l.b16 %v330
    %v387 = vrot.slane %v386, 7
    %vm388 = vcmask 1041409
    %v389 = vsel %vm388, %v387, %v385
    %v390 = vpack.c.b16 %v389, %v389
    %v395 = vunpack.c.l.b16 %v29
    %v396 = vunpack.c.l.b16 %v30
    %v397 = vunpack.c.l.b16 %v31
    %v398 = vunpack.c.l.b16 %v32
    %v399 = vpack.c.b16 %v396, %v395
    %v400 = vpack.c.b16 %v398, %v397
    %v404 = vsel %vm49, %v390, 0
    %406 = vmatprep.subr.bf16.mxu0 0
    %407 = vmatpush1.bf16.msra.mxu0 %v399
    %408 = vmatprep.subr.bf16.mxu0 0
    %409 = vmatpush1.bf16.msra.mxu0 %v400
    %410 = vmatprep.subr.bf16.mxu0 0
    %411 = vmatpush1.bf16.msra.mxu0 0
    %412 = vmatprep.subr.bf16.mxu0 0
    %413 = vmatpush1.bf16.msra.mxu0 0
    %414 = vmatprep.subr.bf16.mxu0 0
    %415 = vmatpush1.bf16.msra.mxu0 0
    %416 = vmatprep.subr.bf16.mxu0 0
    %417 = vmatpush1.bf16.msra.mxu0 0
    %418 = vmatprep.subr.bf16.mxu0 0
    %419 = vmatpush1.bf16.msra.mxu0 0
    %420 = vmatprep.subr.bf16.mxu0 0
    %421 = vmatpush1.bf16.msra.mxu0 0
    %422 = vmatprep.subr.bf16.mxu0 0
    %423 = vmatpush1.bf16.msra.mxu0 0
    %424 = vmatprep.subr.bf16.mxu0 0
    %425 = vmatpush1.bf16.msra.mxu0 0
    %426 = vmatprep.subr.bf16.mxu0 0
    %427 = vmatpush1.bf16.msra.mxu0 0
    %428 = vmatprep.subr.bf16.mxu0 0
    %429 = vmatpush1.bf16.msra.mxu0 0
    %430 = vmatprep.subr.bf16.mxu0 0
    %431 = vmatpush1.bf16.msra.mxu0 0
    %432 = vmatprep.subr.bf16.mxu0 0
    %433 = vmatpush1.bf16.msra.mxu0 0
    %434 = vmatprep.subr.bf16.mxu0 0
    %435 = vmatpush1.bf16.msra.mxu0 0
    %436 = vmatprep.subr.bf16.mxu0 0
    %437 = vmatpush1.bf16.msra.mxu0 0
    %438 = vmatprep.mubr.bf16.mxu0 0
    %439 = vmatmul.mubr.bf16.gmra.mrb[0].mxu0 %v404
    %v440 = vpop.f32.mrb[0].mxu0
    %v441 = vadd.f32 %v378, %v440
    %v442 = vpop.f32.mrb[0].mxu0
    %v443 = vpop.f32.mrb[0].mxu0
    %v444 = vpop.f32.mrb[0].mxu0
    %445 = vdwg.mxu0
    %v446 = vtanh.pop %v441
    %vm447 = vcmask 254976
    %448 = vst.msk [vmem:[#allocation2] sm:$0x3] %vm447, %v446
    %v451 = vrot.slane %v234, 7
    %v452 = vsel %vm388, %v451, %v232
    %vm454 = vcmask 58368
    %455 = vst.msk [vmem:[#allocation4] sm:$0x3] %vm454, %v452
    // Predicated region
    $region18: #{tpu_custom_call.1} parent=1 // pred_check
      _
    $region19: #{tpu_custom_call.1} parent=1 // pred_check_branch
      %457 = sbr.rel (0) target = $region21
    $region20: #{tpu_custom_call.1} parent=1 // pred_region
      %s459 = ssub.s32 32, 32
      %460 = vsyncadd [#allocation3], %s459
      %s462 = sshll.u32 [#allocation2], 4
      %s463 = int_to_ptr.vmem [resolvable:$true] %s462
      %465 = dma.vmem_to_hbm [thread:$0]  %s463, 32, %s4, [#allocation3]
    $region21: #{tpu_custom_call.1} parent=1 // pred_fallthru
      _
    // Predicated region
    $region22: #{tpu_custom_call.1} parent=1 // pred_check
      _
    $region23: #{tpu_custom_call.1} parent=1 // pred_check_branch
      %467 = sbr.rel (0) target = $region25
    $region24: #{tpu_custom_call.1} parent=1 // pred_region
      %s469 = ssub.s32 32, 32
      %470 = vsyncadd [#allocation5], %s469
      %s472 = sshll.u32 [#allocation4], 4
      %s473 = int_to_ptr.vmem [resolvable:$true] %s472
      %475 = dma.vmem_to_hbm [thread:$0]  %s473, 32, %s5, [#allocation5]
    $region25: #{tpu_custom_call.1} parent=1 // pred_fallthru
      _
    // Predicated region
    $region26: #{tpu_custom_call.1} parent=1 // pred_check
      _
    $region27: #{tpu_custom_call.1} parent=1 // pred_check_branch
      %477 = sbr.rel (0) target = $region29
    $region28: #{tpu_custom_call.1} parent=1 // pred_region
      %478 = dma.done [#allocation3], 32
    $region29: #{tpu_custom_call.1} parent=1 // pred_fallthru
      _
    // Predicated region
    $region30: #{tpu_custom_call.1} parent=1 // pred_check
      _
    $region31: #{tpu_custom_call.1} parent=1 // pred_check_branch
      %480 = sbr.rel (0) target = $region33
    $region32: #{tpu_custom_call.1} parent=1 // pred_region
      %481 = dma.done [#allocation5], 32
    $region33: #{tpu_custom_call.1} parent=1 // pred_fallthru
      _
    %482 = vsyncpa [#allocation3], 1
    %483 = vsyncpa [#allocation5], 1

</llo_original>
